<compile_context>
chip_gen: v5e
topology: v5e:2x2
jax: 0.10.0
libtpu: 0.0.40
codegen_flags: <defaults>
</compile_context>

<pallas_src>
import functools

import numpy as np
import jax
import jax.numpy as jnp
from jax.experimental import pallas as pl
from jax.experimental.pallas import tpu as pltpu


# torch nn.LayerNorm default eps (the module's default norm_layer). Prithvi configs
# that pass eps=1e-6 should change this constant.
LN_EPS = 1e-5


def _tpu_vmem_capacity():
    try:
        info = pltpu.get_tpu_info()
        return int(getattr(info, "vmem_capacity_bytes", 0) or 0)
    except Exception:
        return 0


_VMEM_CAP = _tpu_vmem_capacity()
if _VMEM_CAP and _VMEM_CAP <= 64 * 1024 * 1024:      # v7x-class: 64 MiB physical VMEM
    VMEM_LIMIT = 40 * 1024 * 1024
    SEQ_TILE_CAP = 512
elif _VMEM_CAP:                                      # v5e / v6e: 128 MiB physical VMEM
    VMEM_LIMIT = 96 * 1024 * 1024
    SEQ_TILE_CAP = 1024
else:                                                # unknown backend -> conservative
    VMEM_LIMIT = 48 * 1024 * 1024
    SEQ_TILE_CAP = 512


# ---------------------------------------------------------------------------
# sin/cos positional embeddings (host-side numpy, identical math to the module)
# ---------------------------------------------------------------------------
def get_1d_sincos_pos_embed_from_grid(embed_dim, pos):
    assert embed_dim % 2 == 0
    omega = np.arange(embed_dim // 2, dtype=np.float32)
    omega /= embed_dim / 2.0
    omega = 1.0 / 10000 ** omega
    pos = pos.reshape(-1)
    out = np.einsum("m,d->md", pos, omega)
    return np.concatenate([np.sin(out), np.cos(out)], axis=1)


def get_3d_sincos_pos_embed(embed_dim, grid_size, cls_token=False):
    assert embed_dim % 16 == 0
    t_size, h_size, w_size = grid_size
    w_embed_dim = embed_dim // 16 * 6
    h_embed_dim = embed_dim // 16 * 6
    t_embed_dim = embed_dim // 16 * 4
    w_pos = get_1d_sincos_pos_embed_from_grid(w_embed_dim, np.arange(w_size))
    h_pos = get_1d_sincos_pos_embed_from_grid(h_embed_dim, np.arange(h_size))
    t_pos = get_1d_sincos_pos_embed_from_grid(t_embed_dim, np.arange(t_size))
    w_pos = np.tile(w_pos, (t_size * h_size, 1))
    h_pos = np.tile(np.repeat(h_pos, w_size, axis=0), (t_size, 1))
    t_pos = np.repeat(t_pos, h_size * w_size, axis=0)
    pos = np.concatenate((w_pos, h_pos, t_pos), axis=1)
    if cls_token:
        pos = np.concatenate([np.zeros([1, embed_dim]), pos], axis=0)
    return pos.astype(np.float32)


# ---------------------------------------------------------------------------
# in-kernel helpers
# ---------------------------------------------------------------------------
_SQRT_2_OVER_PI = 0.7978845608028654


def _gelu(x):
    # tanh-approx GELU -> transcendental goes to the EUP slot (frees VALU).
    # TODO(synk): reference nn.GELU default is exact-erf; swap in an erf impl if bit-parity is required.
    return 0.5 * x * (1.0 + jnp.tanh(_SQRT_2_OVER_PI * (x + 0.044715 * x * x * x)))


def _layernorm(x, g, b, eps=LN_EPS):
    mu = jnp.mean(x, axis=-1, keepdims=True)
    var = jnp.mean((x - mu) ** 2, axis=-1, keepdims=True)
    return (x - mu) * jax.lax.rsqrt(var + eps) * g + b


# ---------------------------------------------------------------------------
# Pallas kernels
# ---------------------------------------------------------------------------
def patch_embed_kernel(x_ref, w_ref, b_ref, pos_ref, cls_ref, o_ref):
    """Patch projection (Conv3d as matmul, bf16 MXU) + pos add + fused cls row + zero pad.

    Writes cls / token / pad rows with direct sliced stores (no concat copy).
    """
    L = x_ref.shape[1]
    S_pad, E = o_ref.shape[1], o_ref.shape[2]
    tok = jnp.dot(x_ref[0].astype(jnp.bfloat16), w_ref[...],
                  preferred_element_type=jnp.float32)
    tok = tok + b_ref[...] + pos_ref[...]
    o_ref[0, :1, :] = cls_ref[...]
    o_ref[0, 1:L + 1, :] = tok
    if S_pad > L + 1:
        o_ref[0, L + 1:, :] = jnp.zeros((S_pad - L - 1, E), jnp.float32)


def norm_linear_kernel(x_ref, g_ref, b_ref, w_ref, bias_ref, o_ref):
    """Fused LayerNorm -> Linear (bf16 MXU, f32 accumulate)."""
    xn = _layernorm(x_ref[0], g_ref[...], b_ref[...]).astype(jnp.bfloat16)
    o_ref[0] = jnp.dot(xn, w_ref[...], preferred_element_type=jnp.float32) + bias_ref[...]


def norm_linear_add_kernel(x_ref, g_ref, b_ref, w_ref, bias_ref, add_ref, o_ref):
    """Fused LayerNorm -> Linear -> + residual/pos add."""
    xn = _layernorm(x_ref[0], g_ref[...], b_ref[...]).astype(jnp.bfloat16)
    o_ref[0] = (jnp.dot(xn, w_ref[...], preferred_element_type=jnp.float32)
                + bias_ref[...] + add_ref[...])


def block_kernel(num_heads, seq_real, x_ref, ln1g, ln1b, qw, kw, vw, qb, kb, vb,
                 projw, projb, ln2g, ln2b, fc1w, fc1b, fc2w, fc2b, o_ref):
    """One pre-norm ViT block (timm Block semantics) for a single batch element.

    QKV / output projections are full-width MXU matmuls; the head split / merge is
    relayout-only (lane slices + stack, lane concat). Padded rows (>= seq_real) carry
    garbage-but-finite values but are masked as attention keys and dropped at the end,
    so valid rows are unaffected.
    """
    x = x_ref[0]                                            # (S, D) f32
    S, D = x.shape
    H = num_heads
    hd = D // H
    scale = float(hd) ** -0.5

    # --- attention branch ---
    xn = _layernorm(x, ln1g[...], ln1b[...]).astype(jnp.bfloat16)        # (S, D)

    # full-width projections: N = D on the MXU (no per-head N=hd matmuls)
    qf = (jnp.dot(xn, qw[...], preferred_element_type=jnp.float32) + qb[...]).astype(jnp.bfloat16)
    kf = (jnp.dot(xn, kw[...], preferred_element_type=jnp.float32) + kb[...]).astype(jnp.bfloat16)
    vf = (jnp.dot(xn, vw[...], preferred_element_type=jnp.float32) + vb[...]).astype(jnp.bfloat16)

    # columns are head-major -> (H, S, hd) via static lane slices + major-dim stack
    def split_heads(a):
        return jnp.stack([a[:, h * hd:(h + 1) * hd] for h in range(H)], axis=0)

    q = split_heads(qf)
    k = split_heads(kf)
    v = split_heads(vf)

    s = jnp.einsum("hqd,hkd->hqk", q, k, preferred_element_type=jnp.float32) * scale  # (H,S,S)
    if seq_real < S:                     # mask padded key positions (static condition)
        kid = jax.lax.broadcasted_iota(jnp.int32, (1, 1, S), 2)
        s = jnp.where(kid < seq_real, s, -1e30)
    s = s - jnp.max(s, axis=-1, keepdims=True)
    prob = jnp.exp(s)
    prob = prob * pl.reciprocal(jnp.sum(prob, axis=-1, keepdims=True), approx=True)
    o = jnp.einsum("hqk,hkd->hqd", prob.astype(jnp.bfloat16), v,
                   preferred_element_type=jnp.float32)                  # (H, S, hd)

    # merge heads along lanes -> (S, D); single full-width output projection matmul
    oc = jnp.concatenate([o[h] for h in range(H)], axis=-1).astype(jnp.bfloat16)
    x = x + jnp.dot(oc, projw[...], preferred_element_type=jnp.float32) + projb[...]

    # --- MLP branch ---
    xn2 = _layernorm(x, ln2g[...], ln2b[...]).astype(jnp.bfloat16)
    h1 = jnp.dot(xn2, fc1w[...], preferred_element_type=jnp.float32) + fc1b[...]
    h1 = _gelu(h1).astype(jnp.bfloat16)
    x = x + jnp.dot(h1, fc2w[...], preferred_element_type=jnp.float32) + fc2b[...]

    o_ref[0] = x


# ---------------------------------------------------------------------------
# pallas_call wrappers
# ---------------------------------------------------------------------------
def _full_spec(a):
    n = a.ndim
    return pl.BlockSpec(a.shape, lambda *_: (0,) * n)


def _seq_tile(s, cap=None):
    cap = SEQ_TILE_CAP if cap is None else cap
    if s <= cap:
        return s
    for ts in range(cap, 0, -8):
        if s % ts == 0:
            return ts
    return s


def pallas_patch_embed(xp, patch_w, patch_b, pos_tok, cls_row, s_pad):
    B, L, P = xp.shape
    E = patch_w.shape[1]
    return pl.pallas_call(
        patch_embed_kernel,
        out_shape=jax.ShapeDtypeStruct((B, s_pad, E), jnp.float32),
        grid=(B,),
        in_specs=[pl.BlockSpec((1, L, P), lambda i: (i, 0, 0)),
                  _full_spec(patch_w), _full_spec(patch_b),
                  _full_spec(pos_tok), _full_spec(cls_row)],
        out_specs=pl.BlockSpec((1, s_pad, E), lambda i: (i, 0, 0)),
        compiler_params=pltpu.CompilerParams(
            dimension_semantics=("parallel",), vmem_limit_bytes=VMEM_LIMIT),
    )(xp, patch_w, patch_b, pos_tok, cls_row)


def pallas_norm_linear(x, g, b, w, bias, add=None):
    B, S, Din = x.shape
    Dout = w.shape[1]
    ts = _seq_tile(S)
    ns = S // ts
    args = [x, g, b, w, bias]
    in_specs = [pl.BlockSpec((1, ts, Din), lambda i, j: (i, j, 0)),
                _full_spec(g), _full_spec(b), _full_spec(w), _full_spec(bias)]
    kernel = norm_linear_kernel
    bytes_acc = B * S * (Din + Dout) * 4 + Din * Dout * 2 + (2 * Din + Dout) * 4
    if add is not None:
        args.append(add)
        in_specs.append(pl.BlockSpec((ts, Dout), lambda i, j: (j, 0)))
        kernel = norm_linear_add_kernel
        bytes_acc += S * Dout * 4
    ce = pl.CostEstimate(flops=int(2 * B * S * Din * Dout),
                         transcendentals=int(B * S),
                         bytes_accessed=int(bytes_acc))
    return pl.pallas_call(
        kernel,
        out_shape=jax.ShapeDtypeStruct((B, S, Dout), jnp.float32),
        grid=(B, ns),
        in_specs=in_specs,
        out_specs=pl.BlockSpec((1, ts, Dout), lambda i, j: (i, j, 0)),
        compiler_params=pltpu.CompilerParams(
            dimension_semantics=("parallel", "parallel"), vmem_limit_bytes=VMEM_LIMIT),
        cost_estimate=ce,
    )(*args)


def pallas_block(x, p, num_heads, seq_real):
    B, S, D = x.shape
    hid = p["fc1_w"].shape[1]
    flops = B * (3 * 2 * S * D * D        # qkv projections
                 + 2 * 2 * S * S * D      # scores + prob@v
                 + 2 * S * D * D          # output projection
                 + 2 * 2 * S * D * hid)   # mlp
    trans = B * (num_heads * S * S + S * hid + 2 * S)
    bytes_acc = (2 * B * S * D * 4                       # activations in/out (f32)
                 + (4 * D * D + 2 * D * hid) * 2         # bf16 weights
                 + (7 * D + hid) * 4)                    # f32 biases / norms
    ce = pl.CostEstimate(flops=int(flops), transcendentals=int(trans),
                         bytes_accessed=int(bytes_acc))
    args = [x, p["ln1_g"], p["ln1_b"], p["q_w"], p["k_w"], p["v_w"],
            p["q_b"], p["k_b"], p["v_b"], p["proj_w"], p["proj_b"],
            p["ln2_g"], p["ln2_b"], p["fc1_w"], p["fc1_b"], p["fc2_w"], p["fc2_b"]]
    in_specs = [pl.BlockSpec((1, S, D), lambda i: (i, 0, 0))] + [_full_spec(a) for a in args[1:]]
    # TODO(synk): add a parallel query-tile grid axis (flash-style) so v7x's 2nd
    #   TensorCore has work when B is small, and single-buffer the weight specs.
    return pl.pallas_call(
        functools.partial(block_kernel, num_heads, seq_real),
        out_shape=jax.ShapeDtypeStruct((B, S, D), jnp.float32),
        grid=(B,),
        in_specs=in_specs,
        out_specs=pl.BlockSpec((1, S, D), lambda i: (i, 0, 0)),
        compiler_params=pltpu.CompilerParams(
            dimension_semantics=("parallel",), vmem_limit_bytes=VMEM_LIMIT),
        cost_estimate=ce,
    )(*args)


# ---------------------------------------------------------------------------
# parameters (deterministic; matmul weights stored in bf16)
# ---------------------------------------------------------------------------
def make_params(key, cfg):
    E, Dd = cfg["embed_dim"], cfg["decoder_embed_dim"]
    C, p, tub = cfg["in_chans"], cfg["patch_size"], cfg["tubelet_size"]
    P = C * tub * p * p
    hid, dhid = int(E * cfg["mlp_ratio"]), int(Dd * cfg["mlp_ratio"])
    keys = iter(jax.random.split(key, 512))
    bf16 = jnp.bfloat16

    def xavier(shape):
        lim = (6.0 / (shape[0] + shape[1])) ** 0.5
        return jax.random.uniform(next(keys), shape, jnp.float32, -lim, lim)

    def block_params(D, Hmlp):
        zeros = lambda s: jnp.zeros(s, jnp.float32)
        # q_w/k_w/v_w are the transposed column-slabs of nn.Linear(D,3D).weight; each
        # slab's output columns are head-major ([head0 | head1 | ...]), matching timm.
        return dict(
            ln1_g=jnp.ones((1, D), jnp.float32), ln1_b=zeros((1, D)),
            q_w=xavier((D, D)).astype(bf16), k_w=xavier((D, D)).astype(bf16),
            v_w=xavier((D, D)).astype(bf16),
            q_b=zeros((1, D)), k_b=zeros((1, D)), v_b=zeros((1, D)),
            proj_w=xavier((D, D)).astype(bf16), proj_b=zeros((1, D)),
            ln2_g=jnp.ones((1, D), jnp.float32), ln2_b=zeros((1, D)),
            fc1_w=xavier((D, Hmlp)).astype(bf16), fc1_b=zeros((1, Hmlp)),
            fc2_w=xavier((Hmlp, D)).astype(bf16), fc2_b=zeros((1, D)),
        )

    return dict(
        patch_w=xavier((P, E)).astype(bf16),      # Conv3d(kernel==stride) weight, flattened (C,tub,ph,pw), transposed
        patch_b=jnp.zeros((1, E), jnp.float32),
        cls_token=0.02 * jax.random.normal(next(keys), (1, E), jnp.float32),
        blocks=[block_params(E, hid) for _ in range(cfg["depth"])],
        norm_g=jnp.ones((1, E), jnp.float32), norm_b=jnp.zeros((1, E), jnp.float32),
        dec_embed_w=xavier((E, Dd)).astype(bf16), dec_embed_b=jnp.zeros((1, Dd), jnp.float32),
        mask_token=0.02 * jax.random.normal(next(keys), (1, Dd), jnp.float32),  # unused at mask_ratio=0
        dec_blocks=[block_params(Dd, dhid) for _ in range(cfg["decoder_depth"])],
        dec_norm_g=jnp.ones((1, Dd), jnp.float32), dec_norm_b=jnp.zeros((1, Dd), jnp.float32),
        dec_pred_w=xavier((Dd, P)).astype(bf16), dec_pred_b=jnp.zeros((1, P), jnp.float32),
    )


# ---------------------------------------------------------------------------
# forward pass (TemporalViTEncoder.forward with mask_ratio=0.0, no coord encoding,
# encoder_only=False so the decoder path is exercised)
# ---------------------------------------------------------------------------
def temporal_vit_forward(params, imgs, cfg):
    p, tub, C = cfg["patch_size"], cfg["tubelet_size"], cfg["in_chans"]
    E, Dd = cfg["embed_dim"], cfg["decoder_embed_dim"]
    B, _, Himg, Wimg = imgs.shape
    T = cfg["num_frames"]
    Tp, Hp, Wp = T // tub, Himg // p, Wimg // p
    L = Tp * Hp * Wp
    S = L + 1                                  # cls + patch tokens
    S_pad = ((S + 15) // 16) * 16              # 16-row aligned (bf16 sublane pack); pads masked in attention

    x = imgs.reshape(B, C, T, Himg, Wimg)
    # Conv3d(stride == kernel) == patchify + matmul; flatten order (C, tub, ph, pw)
    xp = x.reshape(B, C, Tp, tub, Hp, p, Wp, p)
    xp = xp.transpose(0, 2, 4, 6, 1, 3, 5, 7).reshape(B, L, C * tub * p * p)

    pos = get_3d_sincos_pos_embed(E, (Tp, Hp, Wp), cls_token=True)      # (S, E) numpy
    pos_tok = jnp.asarray(pos[1:])
    cls_row = params["cls_token"] + jnp.asarray(pos[:1])                # (1, E) host glue

    # patch projection + pos add + cls row fused; output already padded to S_pad
    tokens = pallas_patch_embed(xp, params["patch_w"], params["patch_b"],
                                pos_tok, cls_row, S_pad)                # (B, S_pad, E)

    # random_masking with mask_ratio=0.0 keeps every token; its per-sample permutation is
    # exactly inverted by the decoder's ids_restore gather, so it is the identity end-to-end.
    # TODO(synk): per-sample random shuffle (torch.rand/argsort) not reproduced; no-op at mask_ratio=0.

    for blk in params["blocks"]:
        tokens = pallas_block(tokens, blk, cfg["num_heads"], seq_real=S)

    # ---- decoder ----
    dec_pos = get_3d_sincos_pos_embed(Dd, (Tp, Hp, Wp), cls_token=True)
    dec_pos_pad = np.zeros((S_pad, Dd), np.float32)
    dec_pos_pad[:S] = dec_pos
    # mask_ratio=0 -> zero mask tokens and identity gather; fuse enc-norm + decoder_embed + pos add.
    x = pallas_norm_linear(tokens, params["norm_g"], params["norm_b"],
                           params["dec_embed_w"], params["dec_embed_b"],
                           add=jnp.asarray(dec_pos_pad))
    for blk in params["dec_blocks"]:
        x = pallas_block(x, blk, cfg["decoder_num_heads"], seq_real=S)
    # fused decoder_norm + decoder_pred
    x = pallas_norm_linear(x, params["dec_norm_g"], params["dec_norm_b"],
                           params["dec_pred_w"], params["dec_pred_b"])
    pred = x[:, 1:S, :]                        # drop cls token and padding -> (B, L, tub*p*p*C)

    # forward_loss is computed and discarded by the PyTorch forward (NaN at mask_ratio=0
    # since mask.sum()==0); it does not affect the returned pred.
    return pred


# ---------------------------------------------------------------------------
if __name__ == "__main__":
    cfg = dict(
        patch_size=4, num_frames=1, tubelet_size=1, in_chans=4,
        embed_dim=64, depth=2, num_heads=4,
        decoder_embed_dim=32, decoder_depth=1, decoder_num_heads=4,
        mlp_ratio=4.0,
    )
    key = jax.random.PRNGKey(0)
    k_param, k_img = jax.random.split(key)
    params = make_params(k_param, cfg)
    imgs = jax.random.normal(k_img, (2, cfg["in_chans"], 16, 16), dtype=jnp.float32)

    pred = temporal_vit_forward(params, imgs, cfg)
    pred = jax.block_until_ready(pred)

    expected = (2, (16 // cfg["patch_size"]) ** 2,
                cfg["tubelet_size"] * cfg["patch_size"] ** 2 * cfg["in_chans"])
    assert pred.shape == expected, (pred.shape, expected)
    assert bool(jnp.all(jnp.isfinite(pred)))
    print("KERNEL_OK")
</pallas_src>

<mosaic_0001>
module attributes {stable_mosaic.version = 11 : i64} {
  func.func @patch_embed_kernel(%arg0: i32, %arg1: memref<1x16x64xf32, #tpu.memory_space<vmem>>, %arg2: memref<64x64xbf16, #tpu.memory_space<vmem>>, %arg3: memref<1x64xf32, #tpu.memory_space<vmem>>, %arg4: memref<16x64xf32, #tpu.memory_space<vmem>>, %arg5: memref<1x64xf32, #tpu.memory_space<vmem>>, %arg6: memref<1x32x64xf32, #tpu.memory_space<vmem>>) attributes {dimension_semantics = [#tpu.dimension_semantics<parallel>], iteration_bounds = array<i64: 2>, scalar_prefetch = 0 : i64, scratch_operands = 0 : i64, tpu.core_type = #tpu.core_type<tc>, window_params = [{transform_indices = @transform_0, window_bounds = array<i64: 1, 16, 64>}, {pipeline_mode = #tpu.pipeline_mode<synchronous>, transform_indices = @transform_1, window_bounds = array<i64: 64, 64>}, {pipeline_mode = #tpu.pipeline_mode<synchronous>, transform_indices = @transform_2, window_bounds = array<i64: 1, 64>}, {pipeline_mode = #tpu.pipeline_mode<synchronous>, transform_indices = @transform_3, window_bounds = array<i64: 16, 64>}, {pipeline_mode = #tpu.pipeline_mode<synchronous>, transform_indices = @transform_4, window_bounds = array<i64: 1, 64>}, {transform_indices = @transform_5, window_bounds = array<i64: 1, 32, 64>}]} {
    %c0 = arith.constant 0 : index
    %c0_0 = arith.constant 0 : index
    %c0_1 = arith.constant 0 : index
    %0 = vector.load %arg1[%c0, %c0_0, %c0_1] : memref<1x16x64xf32, #tpu.memory_space<vmem>>, vector<1x16x64xf32>
    %1 = vector.shape_cast %0 : vector<1x16x64xf32> to vector<16x64xf32>
    %2 = arith.truncf %1 : vector<16x64xf32> to vector<16x64xbf16>
    %c0_2 = arith.constant 0 : index
    %c0_3 = arith.constant 0 : index
    %3 = vector.load %arg2[%c0_2, %c0_3] : memref<64x64xbf16, #tpu.memory_space<vmem>>, vector<64x64xbf16>
    %cst = arith.constant dense<0.000000e+00> : vector<16x64xf32>
    %4 = tpu.matmul %2, %3, %cst {dimension_numbers = #tpu.dot_dimension_numbers<[1], [0], [0], [1], [0, 0, 1, 1], [], []>} : vector<16x64xbf16>, vector<64x64xbf16>, vector<16x64xf32> -> vector<16x64xf32>
    %c0_4 = arith.constant 0 : index
    %c0_5 = arith.constant 0 : index
    %5 = vector.load %arg3[%c0_4, %c0_5] : memref<1x64xf32, #tpu.memory_space<vmem>>, vector<1x64xf32>
    %6 = vector.broadcast %5 : vector<1x64xf32> to vector<16x64xf32>
    %7 = arith.addf %4, %6 : vector<16x64xf32>
    %c0_6 = arith.constant 0 : index
    %c0_7 = arith.constant 0 : index
    %8 = vector.load %arg4[%c0_6, %c0_7] : memref<16x64xf32, #tpu.memory_space<vmem>>, vector<16x64xf32>
    %9 = arith.addf %7, %8 : vector<16x64xf32>
    %c0_8 = arith.constant 0 : index
    %c0_9 = arith.constant 0 : index
    %10 = vector.load %arg5[%c0_8, %c0_9] : memref<1x64xf32, #tpu.memory_space<vmem>>, vector<1x64xf32>
    %c0_10 = arith.constant 0 : index
    %c0_11 = arith.constant 0 : index
    %c0_12 = arith.constant 0 : index
    %11 = vector.load %arg6[%c0_10, %c0_11, %c0_12] : memref<1x32x64xf32, #tpu.memory_space<vmem>>, vector<1x1x64xf32>
    %12 = vector.shape_cast %11 : vector<1x1x64xf32> to vector<1x64xf32>
    %13 = vector.shape_cast %10 : vector<1x64xf32> to vector<1x1x64xf32>
    tpu.vector_store %arg6[%c0_10, %c0_11, %c0_12], %13 {strides = array<i32>} : memref<1x32x64xf32, #tpu.memory_space<vmem>>, vector<1x1x64xf32>,
    %c0_13 = arith.constant 0 : index
    %c1 = arith.constant 1 : index
    %c0_14 = arith.constant 0 : index
    %14 = vector.load %arg6[%c0_13, %c1, %c0_14] : memref<1x32x64xf32, #tpu.memory_space<vmem>>, vector<1x16x64xf32>
    %15 = vector.shape_cast %14 : vector<1x16x64xf32> to vector<16x64xf32>
    %16 = vector.shape_cast %9 : vector<16x64xf32> to vector<1x16x64xf32>
    tpu.vector_store %arg6[%c0_13, %c1, %c0_14], %16 {strides = array<i32>} : memref<1x32x64xf32, #tpu.memory_space<vmem>>, vector<1x16x64xf32>,
    %cst_15 = arith.constant 0.000000e+00 : f32
    %17 = vector.broadcast %cst_15 : f32 to vector<15x64xf32>
    %c0_16 = arith.constant 0 : index
    %c17 = arith.constant 17 : index
    %c0_17 = arith.constant 0 : index
    %18 = vector.load %arg6[%c0_16, %c17, %c0_17] : memref<1x32x64xf32, #tpu.memory_space<vmem>>, vector<1x15x64xf32>
    %19 = vector.shape_cast %18 : vector<1x15x64xf32> to vector<15x64xf32>
    %20 = vector.shape_cast %17 : vector<15x64xf32> to vector<1x15x64xf32>
    tpu.vector_store %arg6[%c0_16, %c17, %c0_17], %20 {strides = array<i32>} : memref<1x32x64xf32, #tpu.memory_space<vmem>>, vector<1x15x64xf32>,
    return
  }
  func.func @transform_0(%arg0: i32) -> (i32, i32, i32) {
    %c0_i32 = arith.constant 0 : i32
    %c0_i32_0 = arith.constant 0 : i32
    %c0_i32_1 = arith.constant 0 : i32
    return %arg0, %c0_i32, %c0_i32_0 : i32, i32, i32
  }
  func.func @transform_1(%arg0: i32) -> (i32, i32) {
    %c0_i32 = arith.constant 0 : i32
    %c0_i32_0 = arith.constant 0 : i32
    %c0_i32_1 = arith.constant 0 : i32
    return %c0_i32, %c0_i32_0 : i32, i32
  }
  func.func @transform_2(%arg0: i32) -> (i32, i32) {
    %c0_i32 = arith.constant 0 : i32
    %c0_i32_0 = arith.constant 0 : i32
    %c0_i32_1 = arith.constant 0 : i32
    return %c0_i32, %c0_i32_0 : i32, i32
  }
  func.func @transform_3(%arg0: i32) -> (i32, i32) {
    %c0_i32 = arith.constant 0 : i32
    %c0_i32_0 = arith.constant 0 : i32
    %c0_i32_1 = arith.constant 0 : i32
    return %c0_i32, %c0_i32_0 : i32, i32
  }
  func.func @transform_4(%arg0: i32) -> (i32, i32) {
    %c0_i32 = arith.constant 0 : i32
    %c0_i32_0 = arith.constant 0 : i32
    %c0_i32_1 = arith.constant 0 : i32
    return %c0_i32, %c0_i32_0 : i32, i32
  }
  func.func @transform_5(%arg0: i32) -> (i32, i32, i32) {
    %c0_i32 = arith.constant 0 : i32
    %c0_i32_0 = arith.constant 0 : i32
    %c0_i32_1 = arith.constant 0 : i32
    return %arg0, %c0_i32, %c0_i32_0 : i32, i32, i32
  }
}

</mosaic_0001>

<llo_original>
// kernel: tpu_custom_call.1
$region0: #{tpu_custom_call.1}
  #allocation0 [shape = 'u32[]', space=smem, size = 0x4, offset = 0x4, fixed_abs, tag = 'smem constant byte address 0x4 - core index']
  #allocation1 [shape = 'u32[72,128]{1,0:T(1,128)}', space=vmem, size = 0x9000, scoped, tag = 'internal scratch']
  %s0 = inlined_call_operand.hbm [shape: f32[2,16,64], index: 0, kind: input, shape index: {}]
  %s1 = inlined_call_operand.hbm [shape: bf16[64,64], index: 1, kind: input, shape index: {}]
  %s2 = inlined_call_operand.vmem [shape: f32[1,64], index: 2, kind: input, shape index: {}]
  %s3 = inlined_call_operand.hbm [shape: f32[16,64], index: 3, kind: input, shape index: {}]
  %s4 = inlined_call_operand.vmem [shape: f32[1,64], index: 4, kind: input, shape index: {}]
  %s5 = inlined_call_operand.hbm [shape: f32[2,32,64], index: 5, kind: output, shape index: {}]
  %s6 = sld [smem:[#allocation0]]
  $region65: #{tpu_custom_call.1} parent=0
    _
  %s8 = ssub.s32 1, %s6
  %s9 = scalar_select 0, %s8, %s6
  $region1: #{tpu_custom_call.1} parent=0
    #allocation2 [shape = 'u8[16384]{0}', space=vmem, size = 0x4000, scoped, tag = 'input window, operand 0']
    #allocation3 [shape = 's32[2]{0}', space=sflag, size = 0x8, scoped, tag = 'scoped memory for tpu_custom_call.1']
    #allocation4 [shape = 's32[2]{0}', space=sflag, size = 0x8, scoped, tag = 'scoped memory for tpu_custom_call.1']
    #allocation5 [shape = 'u8[16384]{0}', space=vmem, size = 0x4000, scoped, tag = 'input window, operand 1, single buffered']
    #allocation6 [shape = 's32[1]{0}', space=sflag, size = 0x4, scoped, tag = 'scoped memory for tpu_custom_call.1']
    #allocation7 [shape = 'u8[8192]{0}', space=vmem, size = 0x2000, scoped, tag = 'input window, operand 3, single buffered']
    #allocation8 [shape = 'u8[32768]{0}', space=vmem, size = 0x8000, scoped, tag = 'output window, operand 0']
    %10 = vsyncpa [#allocation3], 0
    %s11 = scalar_lea.sflag [#allocation3], 1
    %12 = vsyncpa %s11, 0
    %13 = vsyncpa [#allocation6], 0
    %14 = vsyncpa [#allocation4], 0
    %s15 = scalar_lea.sflag [#allocation4], 1
    %16 = vsyncpa %s15, 0
    loop: start=0, step=1, limit=4
    $region2: #{tpu_custom_call.1} parent=1 // loop_pre_header
      _
    $region3: #{tpu_custom_call.1} parent=1 // loop_header
      %s18 = sphi 0, %s22
      %p19 = scmp.ge.s32.totalorder %s18, 4
      %s28 = sphi 0, %s30
      %s31 = sphi 0, %s28
      %s32 = sphi 0, %s31
      %s48 = sphi 0, %s32
      %s52 = sphi 0, %s52
      %s54 = sphi 0, %s52
      %s55 = sphi 0, %s54
      %s69 = sphi 0, %s55
      %s73 = sphi 0, %s73
      %s75 = sphi 0, %s73
      %s76 = sphi 0, %s75
      %s90 = sphi 0, %s76
      %s94 = sphi 0, %s94
      %s96 = sphi 0, %s94
      %s97 = sphi 0, %s96
      %s111 = sphi 0, %s97
      %s115 = sphi 0, %s115
      %s117 = sphi 0, %s115
      %s118 = sphi 0, %s117
      %s132 = sphi 0, %s118
      %s138 = sphi 0, %s140
      %s141 = sphi 0, %s138
      %s142 = sphi 0, %s141
      %s158 = sphi 0, %s142
    $region4: #{tpu_custom_call.1} parent=1 // loop_header_branch
      %21 = sbr.rel (%p19) target = $region8
    $region5: #{tpu_custom_call.1} parent=1 // loop_body
      %s23 = ssub.s32 %s18, 1
      %s24 = ssub.s32 %s18, 2
      %s25 = sadd.s32 %s18, 1
      %s26 = ssub.s32 %s18, %s25
      %p27 = scmp.eq.s32.totalorder %s26, 0
      %s29 = sadd.s32 %s28, 1
      %s30 = scalar_select %p27, %s28, %s29
      %p33 = pneg %p27
      %p34 = scmp.eq.s32.totalorder %s18, 1
      %p35 = por %p33, %p34
      %p36 = scmp.ne.s32.totalorder %s28, %s31
      %p37 = scmp.eq.s32.totalorder %s18, 0
      %p38 = por %p36, %p37
      %p39 = scmp.ne.s32.totalorder %s28, %s31
      %p40 = scmp.eq.s32.totalorder %s23, 1
      %p41 = por %p39, %p40
      %p42 = scmp.ne.s32.totalorder %s31, %s32
      %p43 = scmp.eq.s32.totalorder %s23, 0
      %p44 = por %p42, %p43
      %p45 = scmp.ne.s32.totalorder %s31, %s32
      %p46 = scmp.eq.s32.totalorder %s24, 1
      %p47 = por %p45, %p46
      %p49 = scmp.ne.s32.totalorder %s32, %s48
      %p50 = scmp.eq.s32.totalorder %s24, 0
      %p51 = por %p49, %p50
      %s53 = sadd.s32 %s52, 1
      %p56 = scmp.eq.s32.totalorder %s18, 1
      %p57 = scmp.ne.s32.totalorder %s52, %s54
      %p58 = scmp.eq.s32.totalorder %s18, 0
      %p59 = por %p57, %p58
      %p60 = scmp.ne.s32.totalorder %s52, %s54
      %p61 = scmp.eq.s32.totalorder %s23, 1
      %p62 = por %p60, %p61
      %p63 = scmp.ne.s32.totalorder %s54, %s55
      %p64 = scmp.eq.s32.totalorder %s23, 0
      %p65 = por %p63, %p64
      %p66 = scmp.ne.s32.totalorder %s54, %s55
      %p67 = scmp.eq.s32.totalorder %s24, 1
      %p68 = por %p66, %p67
      %p70 = scmp.ne.s32.totalorder %s55, %s69
      %p71 = scmp.eq.s32.totalorder %s24, 0
      %p72 = por %p70, %p71
      %s74 = sadd.s32 %s73, 1
      %p77 = scmp.eq.s32.totalorder %s18, 1
      %p78 = scmp.ne.s32.totalorder %s73, %s75
      %p79 = scmp.eq.s32.totalorder %s18, 0
      %p80 = por %p78, %p79
      %p81 = scmp.ne.s32.totalorder %s73, %s75
      %p82 = scmp.eq.s32.totalorder %s23, 1
      %p83 = por %p81, %p82
      %p84 = scmp.ne.s32.totalorder %s75, %s76
      %p85 = scmp.eq.s32.totalorder %s23, 0
      %p86 = por %p84, %p85
      %p87 = scmp.ne.s32.totalorder %s75, %s76
      %p88 = scmp.eq.s32.totalorder %s24, 1
      %p89 = por %p87, %p88
      %p91 = scmp.ne.s32.totalorder %s76, %s90
      %p92 = scmp.eq.s32.totalorder %s24, 0
      %p93 = por %p91, %p92
      %s95 = sadd.s32 %s94, 1
      %p98 = scmp.eq.s32.totalorder %s18, 1
      %p99 = scmp.ne.s32.totalorder %s94, %s96
      %p100 = scmp.eq.s32.totalorder %s18, 0
      %p101 = por %p99, %p100
      %p102 = scmp.ne.s32.totalorder %s94, %s96
      %p103 = scmp.eq.s32.totalorder %s23, 1
      %p104 = por %p102, %p103
      %p105 = scmp.ne.s32.totalorder %s96, %s97
      %p106 = scmp.eq.s32.totalorder %s23, 0
      %p107 = por %p105, %p106
      %p108 = scmp.ne.s32.totalorder %s96, %s97
      %p109 = scmp.eq.s32.totalorder %s24, 1
      %p110 = por %p108, %p109
      %p112 = scmp.ne.s32.totalorder %s97, %s111
      %p113 = scmp.eq.s32.totalorder %s24, 0
      %p114 = por %p112, %p113
      %s116 = sadd.s32 %s115, 1
      %p119 = scmp.eq.s32.totalorder %s18, 1
      %p120 = scmp.ne.s32.totalorder %s115, %s117
      %p121 = scmp.eq.s32.totalorder %s18, 0
      %p122 = por %p120, %p121
      %p123 = scmp.ne.s32.totalorder %s115, %s117
      %p124 = scmp.eq.s32.totalorder %s23, 1
      %p125 = por %p123, %p124
      %p126 = scmp.ne.s32.totalorder %s117, %s118
      %p127 = scmp.eq.s32.totalorder %s23, 0
      %p128 = por %p126, %p127
      %p129 = scmp.ne.s32.totalorder %s117, %s118
      %p130 = scmp.eq.s32.totalorder %s24, 1
      %p131 = por %p129, %p130
      %p133 = scmp.ne.s32.totalorder %s118, %s132
      %p134 = scmp.eq.s32.totalorder %s24, 0
      %p135 = por %p133, %p134
      %s136 = ssub.s32 %s18, %s25
      %p137 = scmp.eq.s32.totalorder %s136, 0
      %s139 = sadd.s32 %s138, 1
      %s140 = scalar_select %p137, %s138, %s139
      %p143 = pneg %p137
      %p144 = scmp.eq.s32.totalorder %s18, 1
      %p145 = por %p143, %p144
      %p146 = scmp.ne.s32.totalorder %s138, %s141
      %p147 = scmp.eq.s32.totalorder %s18, 0
      %p148 = por %p146, %p147
      %p149 = scmp.ne.s32.totalorder %s138, %s141
      %p150 = scmp.eq.s32.totalorder %s23, 1
      %p151 = por %p149, %p150
      %p152 = scmp.ne.s32.totalorder %s141, %s142
      %p153 = scmp.eq.s32.totalorder %s23, 0
      %p154 = por %p152, %p153
      %p155 = scmp.ne.s32.totalorder %s141, %s142
      %p156 = scmp.eq.s32.totalorder %s24, 1
      %p157 = por %p155, %p156
      %p159 = scmp.ne.s32.totalorder %s142, %s158
      %p160 = scmp.eq.s32.totalorder %s24, 0
      %p161 = por %p159, %p160
      %p162 = scmp.le.s32.totalorder 1, %s18
      %p163 = scmp.lt.s32.totalorder %s18, 3
      %p164 = pnand %p162, %p163
      %p165 = pneg %p164
      // Predicated region
      $region9: #{tpu_custom_call.1} parent=5 // pred_check
        _
      $region10: #{tpu_custom_call.1} parent=5 // pred_check_branch
        %167 = sbr.rel (%p164) target = $region12
      $region11: #{tpu_custom_call.1} parent=5 // pred_region
        %s168 = ssub.s32 %s18, 1
        // Predicated region
        $region13: #{tpu_custom_call.1} parent=11 // pred_check
          %p169 = pneg %p65
        $region14: #{tpu_custom_call.1} parent=11 // pred_check_branch
          %171 = sbr.rel (%p169) target = $region16
        $region15: #{tpu_custom_call.1} parent=11 // pred_region
          %173 = vsyncadd [#allocation6], 0
          %s174 = sshll.u32 %s1, 4
          %s175 = int_to_ptr.hbm [resolvable:$true] %s174
          %s176 = sshll.u32 [#allocation5], 4
          %s177 = int_to_ptr.vmem [resolvable:$true] %s176
          %182 = dma.hbm_to_vmem [thread:$0]  %s175, 512, %s177, [#allocation6], 64, 64, 4
        $region16: #{tpu_custom_call.1} parent=11 // pred_fallthru
          _
        // Predicated region
        $region17: #{tpu_custom_call.1} parent=11 // pred_check
          %p183 = pneg %p86
        $region18: #{tpu_custom_call.1} parent=11 // pred_check_branch
          %185 = sbr.rel (%p183) target = $region20
        $region19: #{tpu_custom_call.1} parent=11 // pred_region
          _
        $region20: #{tpu_custom_call.1} parent=11 // pred_fallthru
          _
        // Predicated region
        $region21: #{tpu_custom_call.1} parent=11 // pred_check
          %p186 = pneg %p107
        $region22: #{tpu_custom_call.1} parent=11 // pred_check_branch
          %188 = sbr.rel (%p186) target = $region24
        $region23: #{tpu_custom_call.1} parent=11 // pred_region
          %190 = vsyncadd [#allocation6], 0
          %s191 = sshll.u32 %s3, 4
          %s192 = int_to_ptr.hbm [resolvable:$true] %s191
          %s193 = sshll.u32 [#allocation7], 4
          %s194 = int_to_ptr.vmem [resolvable:$true] %s193
          %199 = dma.hbm_to_vmem [thread:$0]  %s192, 256, %s194, [#allocation6], 128, 128, 8
        $region24: #{tpu_custom_call.1} parent=11 // pred_fallthru
          _
        // Predicated region
        $region25: #{tpu_custom_call.1} parent=11 // pred_check
          %p200 = pneg %p128
        $region26: #{tpu_custom_call.1} parent=11 // pred_check_branch
          %202 = sbr.rel (%p200) target = $region28
        $region27: #{tpu_custom_call.1} parent=11 // pred_region
          _
        $region28: #{tpu_custom_call.1} parent=11 // pred_fallthru
          _
      $region12: #{tpu_custom_call.1} parent=5 // pred_fallthru
        _
      %p203 = scmp.lt.s32.totalorder %s18, 2
      // Predicated region
      $region29: #{tpu_custom_call.1} parent=5 // pred_check
        %p204 = pneg %p203
      $region30: #{tpu_custom_call.1} parent=5 // pred_check_branch
        %206 = sbr.rel (%p204) target = $region32
      $region31: #{tpu_custom_call.1} parent=5 // pred_region
        // Predicated region
        $region33: #{tpu_custom_call.1} parent=31 // pred_check
          %p207 = pneg %p38
        $region34: #{tpu_custom_call.1} parent=31 // pred_check_branch
          %209 = sbr.rel (%p207) target = $region36
        $region35: #{tpu_custom_call.1} parent=31 // pred_region
          %s210 = sand.u32 %s28, 1
          %s211 = scalar_lea.sflag [#allocation3], %s210
          %s212 = sand.u32 %s28, 1
          %s213 = smul.addr %s212, 16
          %s214 = scalar_lea.vmem [#allocation2], %s213
          %216 = vsyncadd %s211, 0
          %s217 = smul.addr %s18, 2
          %s218 = smul.addr %s217, 8
          %s219 = scalar_lea.hbm %s0, %s218
          %s220 = sshll.u32 %s219, 4
          %s221 = int_to_ptr.hbm [resolvable:$true] %s220
          %s222 = sshll.u32 %s214, 4
          %s223 = int_to_ptr.vmem [resolvable:$true] %s222
          %228 = dma.hbm_to_vmem [thread:$0]  %s221, 256, %s223, %s211, 128, 128, 8
        $region36: #{tpu_custom_call.1} parent=31 // pred_fallthru
          _
      $region32: #{tpu_custom_call.1} parent=5 // pred_fallthru
        _
      %p229 = scmp.le.s32.totalorder 1, %s18
      %p230 = scmp.lt.s32.totalorder %s18, 3
      %p231 = pnand %p229, %p230
      %p232 = pneg %p231
      // Predicated region
      $region37: #{tpu_custom_call.1} parent=5 // pred_check
        _
      $region38: #{tpu_custom_call.1} parent=5 // pred_check_branch
        %234 = sbr.rel (%p231) target = $region40
      $region39: #{tpu_custom_call.1} parent=5 // pred_region
        %s235 = ssub.s32 %s18, 1
        %s236 = sand.u32 %s31, 1
        %s237 = scalar_lea.sflag [#allocation3], %s236
        %s238 = sand.u32 %s31, 1
        %s239 = smul.addr %s238, 16
        %s240 = scalar_lea.vmem [#allocation2], %s239
        // Predicated region
        $region41: #{tpu_custom_call.1} parent=39 // pred_check
          %p241 = pneg %p44
        $region42: #{tpu_custom_call.1} parent=39 // pred_check_branch
          %243 = sbr.rel (%p241) target = $region44
        $region43: #{tpu_custom_call.1} parent=39 // pred_region
          %245 = dma.done %s237, 256
        $region44: #{tpu_custom_call.1} parent=39 // pred_fallthru
          _
        // Predicated region
        $region45: #{tpu_custom_call.1} parent=39 // pred_check
          %p246 = pneg %p65
        $region46: #{tpu_custom_call.1} parent=39 // pred_check_branch
          %248 = sbr.rel (%p246) target = $region48
        $region47: #{tpu_custom_call.1} parent=39 // pred_region
          %250 = dma.done [#allocation6], 512
        $region48: #{tpu_custom_call.1} parent=39 // pred_fallthru
          _
        // Predicated region
        $region49: #{tpu_custom_call.1} parent=39 // pred_check
          %p251 = pneg %p107
        $region50: #{tpu_custom_call.1} parent=39 // pred_check_branch
          %253 = sbr.rel (%p251) target = $region52
        $region51: #{tpu_custom_call.1} parent=39 // pred_region
          %255 = dma.done [#allocation6], 256
        $region52: #{tpu_custom_call.1} parent=39 // pred_fallthru
          _
        %s256 = sand.u32 %s31, 1
        %s257 = scalar_lea.sflag [#allocation3], %s256
        %s258 = sand.u32 %s31, 1
        %s259 = smul.addr %s258, 16
        %s260 = scalar_lea.vmem [#allocation2], %s259
        %p261 = pneg %p44
        %p262 = pneg %p41
        %p263 = pneg %p65
        %p264 = pneg %p62
        %p265 = pneg %p86
        %p266 = pneg %p83
        %p267 = pneg %p107
        %p268 = pneg %p104
        %p269 = pneg %p128
        %p270 = pneg %p125
        %p271 = pneg %p154
        %p272 = pneg %p151
        %s273 = sand.u32 %s141, 1
        %s274 = scalar_lea.sflag [#allocation4], %s273
        %s275 = sand.u32 %s141, 1
        %s276 = smul.addr %s275, 32
        %s277 = scalar_lea.vmem [#allocation8], %s276
        %v279 = vld [vmem:[%s240] sm:$0xff]
        %v280 = vld [vmem:[%s240 + $0x8] sm:$0xff]
        %v281 = vpack.c.bf16 %v280, %v279
        %v282 = vld [vmem:[#allocation5] sm:$0xf]
        %v283 = vld [vmem:[#allocation5 + $0x4] sm:$0xf]
        %v284 = vld [vmem:[#allocation5 + $0x8] sm:$0xf]
        %v285 = vld [vmem:[#allocation5 + $0xc] sm:$0xf]
        %v286 = vld [vmem:[#allocation5 + $0x10] sm:$0xf]
        %v287 = vld [vmem:[#allocation5 + $0x14] sm:$0xf]
        %v288 = vld [vmem:[#allocation5 + $0x18] sm:$0xf]
        %v289 = vld [vmem:[#allocation5 + $0x1c] sm:$0xf]
        %v290 = vld [vmem:[%s2] sm:$0x1]
        %v292 = vperm.slane %v290, 0
        %v302 = vunpack.c.l.b16 %v282
        %v303 = vunpack.c.l.b16 %v283
        %v304 = vunpack.c.l.b16 %v284
        %v305 = vunpack.c.l.b16 %v285
        %v306 = vunpack.c.l.b16 %v286
        %v307 = vunpack.c.l.b16 %v287
        %v308 = vunpack.c.l.b16 %v288
        %v309 = vunpack.c.l.b16 %v289
        %v310 = vpack.c.b16 %v303, %v302
        %v311 = vpack.c.b16 %v305, %v304
        %v312 = vpack.c.b16 %v307, %v306
        %v313 = vpack.c.b16 %v309, %v308
        %vm318 = vcmask 523264
        %v320 = vsel %vm318, %v281, 0
        %322 = vmatpush.bf16.msra.mxu0 0
        %323 = vmatpush.bf16.msra.mxu0 0
        %324 = vmatpush.bf16.msra.mxu0 0
        %325 = vmatpush.bf16.msra.mxu0 0
        %326 = vmatpush.bf16.msra.mxu0 %v313
        %327 = vmatpush.bf16.msra.mxu0 %v312
        %328 = vmatpush.bf16.msra.mxu0 %v311
        %329 = vmatpush.bf16.msra.mxu0 %v310
        %330 = vmatmul.bf16.gmra.mxu0 %v320
        %v331 = vpop.f32.mrf.mxu0
        %v332 = vadd.f32 %v292, %v331
        %v333 = vpop.f32.mrf.mxu0
        %v334 = vadd.f32 %v292, %v333
        %335 = vdwg.mxu0
        %v336 = vld [vmem:[#allocation7] sm:$0xff]
        %v337 = vld [vmem:[#allocation7 + $0x8] sm:$0xff]
        %v338 = vadd.f32 %v332, %v336
        %v339 = vadd.f32 %v334, %v337
        %v340 = vld [vmem:[%s4] sm:$0x1]
        %vm341 = vcmask 516096
        %342 = vst.msk [vmem:[%s277] sm:$0x1] %vm341, %v340
        %343 = vst.msk [vmem:[%s277 + $0x1] sm:$0xff] %vm318, %v338
        %344 = vst.msk [vmem:[%s277 + $0x9] sm:$0xff] %vm318, %v339
        %345 = vst.msk [vmem:[%s277 + $0x11] sm:$0xff] %vm318, 0.0
        %vm346 = vcmask 522240
        %347 = vst.msk [vmem:[%s277 + $0x19] sm:$0x7f] %vm346, 0.0
        %s348 = sand.u32 %s141, 1
        %s349 = scalar_lea.sflag [#allocation4], %s348
        %s350 = sand.u32 %s141, 1
        %s351 = smul.addr %s350, 32
        %s352 = scalar_lea.vmem [#allocation8], %s351
        // Predicated region
        $region53: #{tpu_custom_call.1} parent=39 // pred_check
          %p353 = pneg %p151
        $region54: #{tpu_custom_call.1} parent=39 // pred_check_branch
          %355 = sbr.rel (%p353) target = $region56
        $region55: #{tpu_custom_call.1} parent=39 // pred_region
          %357 = vsyncadd %s349, 0
          %s358 = smul.addr %s23, 4
          %s359 = smul.addr %s358, 8
          %s360 = scalar_lea.hbm %s5, %s359
          %s361 = sshll.u32 %s352, 4
          %s362 = int_to_ptr.vmem [resolvable:$true] %s361
          %s363 = sshll.u32 %s360, 4
          %s364 = int_to_ptr.hbm [resolvable:$true] %s363
          %369 = dma.vmem_to_hbm [thread:$0]  %s362, 512, %s364, %s349, 128, 128, 8
        $region56: #{tpu_custom_call.1} parent=39 // pred_fallthru
          _
      $region40: #{tpu_custom_call.1} parent=5 // pred_fallthru
        _
      %p370 = scmp.le.s32.totalorder 2, %s18
      // Predicated region
      $region57: #{tpu_custom_call.1} parent=5 // pred_check
        %p371 = pneg %p370
      $region58: #{tpu_custom_call.1} parent=5 // pred_check_branch
        %373 = sbr.rel (%p371) target = $region60
      $region59: #{tpu_custom_call.1} parent=5 // pred_region
        %s374 = ssub.s32 %s18, 2
        // Predicated region
        $region61: #{tpu_custom_call.1} parent=59 // pred_check
          %p375 = pneg %p157
        $region62: #{tpu_custom_call.1} parent=59 // pred_check_branch
          %377 = sbr.rel (%p375) target = $region64
        $region63: #{tpu_custom_call.1} parent=59 // pred_region
          %s378 = sand.u32 %s142, 1
          %s379 = scalar_lea.sflag [#allocation4], %s378
          %s380 = sand.u32 %s142, 1
          %s381 = smul.addr %s380, 32
          %s382 = scalar_lea.vmem [#allocation8], %s381
          %384 = dma.done %s379, 512
        $region64: #{tpu_custom_call.1} parent=59 // pred_fallthru
          _
      $region60: #{tpu_custom_call.1} parent=5 // pred_fallthru
        _
    $region6: #{tpu_custom_call.1} parent=1 // loop_footer
      %s22 = sadd.s32 1, %s18
    $region7: #{tpu_custom_call.1} parent=1 // loop_footer_branch
      %17 = sbr.rel target = $region3
    $region8: #{tpu_custom_call.1} parent=1 // loop_exit
      _
    %385 = vsyncpa [#allocation3], 1
    %s386 = scalar_lea.sflag [#allocation3], 1
    %387 = vsyncpa %s386, 1
    %388 = vsyncpa [#allocation6], 1
    %389 = vsyncpa [#allocation4], 1
    %s390 = scalar_lea.sflag [#allocation4], 1
    %391 = vsyncpa %s390, 1

</llo_original>
